<compile_context>
chip_gen: v7x
topology: tpu7x:2x2x1
jax: 0.10.0
libtpu: 0.0.40
codegen_flags: <defaults>
</compile_context>

<pallas_src>
import jax
import jax.numpy as jnp
from jax import lax
from jax.experimental import pallas as pl
from jax.experimental.pallas import tpu as pltpu

KSIZE = 3  # Conv1d kernel_size=3, padding=1


def _round_up(v, m):
    return (v + m - 1) // m * m


def _double_conv_kernel(kf_ref, kl_ref, x_ref, w1_ref, b1_ref, w2_ref, b2_ref,
                        o_ref, s1_ref, s2_ref):
    # kf_ref/kl_ref: (1, NL) keep-masks in the compute dtype: 0.0 at the first /
    #                last lane of each length-L segment, 1.0 elsewhere.
    # x_ref : (C_in_p,  NL)        batch merged into the lane axis
    # w1_ref: (C_mid_p, 3*C_in_p)  tap-fused, BN1-scale-folded weight slab
    # b1_ref: (C_mid_p, 1)  f32    folded conv1 bias + BN1 bias
    # w2_ref: (C_out,   3*C_mid_p)
    # b2_ref: (C_out, 1)    f32
    # o_ref : (C_out, NL)
    # s1_ref: (3*C_in_p,  NL) VMEM scratch - stacked conv1 operand
    # s2_ref: (3*C_mid_p, NL) VMEM scratch - conv1 output h and its +/-1 shifts
    nl = x_ref.shape[-1]
    ci = x_ref.shape[0]
    cm = b1_ref.shape[0]
    kf = kf_ref[...]                                    # (1, NL)
    kl = kl_ref[...]

    # ---- conv1: stack [x(l-1); x(l); x(l+1)] along sublanes, one K=3C matmul.
    x = x_ref[...]
    s1_ref[pl.ds(0, ci), :] = pltpu.roll(x, 1, 1) * kf            # x[:, l-1], zero at seg start
    s1_ref[pl.ds(ci, ci), :] = x                                  # x[:, l]
    s1_ref[pl.ds(2 * ci, ci), :] = pltpu.roll(x, nl - 1, 1) * kl  # x[:, l+1], zero at seg end

    h = jnp.dot(w1_ref[...], s1_ref[...], preferred_element_type=jnp.float32)
    h = jnp.maximum(h + b1_ref[...], 0.0)                         # bias + ReLU in f32

    # ---- conv2: h lives in planned VMEM scratch (middle band), not in vregs.
    s2_ref[pl.ds(cm, cm), :] = h.astype(s2_ref.dtype)
    hc = s2_ref[pl.ds(cm, cm), :]                                 # re-read: bounds vreg live range
    s2_ref[pl.ds(0, cm), :] = pltpu.roll(hc, 1, 1) * kf
    s2_ref[pl.ds(2 * cm, cm), :] = pltpu.roll(hc, nl - 1, 1) * kl

    y = jnp.dot(w2_ref[...], s2_ref[...], preferred_element_type=jnp.float32)
    o_ref[...] = jnp.maximum(y + b2_ref[...], 0.0).astype(o_ref.dtype)


def _fold_bn(w, cb, g, be, m, v, eps):
    """Fold conv bias + eval-mode BN into (scaled weights, per-channel bias)."""
    s = g / jnp.sqrt(v + eps)
    return w * s[:, None, None], (cb - m) * s + be


def _weight_slab(w, rows, cin_p, dtype):
    """(C_out, C_in, 3) -> lane-dense tap-fused slab (rows, 3*cin_p), zero padded."""
    co, ci, k = w.shape
    slab = jnp.zeros((rows, k * cin_p), jnp.float32)
    for t in range(k):
        slab = slab.at[:co, t * cin_p:t * cin_p + ci].set(w[:, :, t])
    return slab.astype(dtype)


def double_conv_pallas(x, w1, cb1, g1, be1, m1, v1, w2, cb2, g2, be2, m2, v2,
                       *, eps=1e-5, use_bf16=True, out_dtype=jnp.float32,
                       vmem_budget=20 * 1024 * 1024):
    """x: (N, C_in, L) -> (N, C_out, L). Eval-mode BN folded into the conv weights."""
    N, C_in, L = x.shape
    C_mid = w1.shape[0]
    C_out = w2.shape[0]

    cdt = jnp.bfloat16 if use_bf16 else jnp.float32
    itemsize = jnp.dtype(cdt).itemsize
    out_itemsize = jnp.dtype(out_dtype).itemsize
    pack = 16 if use_bf16 else 8           # sublane pack: keep band slices tile-aligned
    C_in_p = _round_up(C_in, pack)
    C_mid_p = _round_up(C_mid, pack)

    # ---- fold BN + bias, build tap-fused weight slabs / bias columns.
    w1f, b1 = _fold_bn(w1, cb1, g1, be1, m1, v1, eps)
    w2f, b2 = _fold_bn(w2, cb2, g2, be2, m2, v2, eps)
    w1_slab = _weight_slab(w1f, C_mid_p, C_in_p, cdt)     # (C_mid_p, 3*C_in_p)
    w2_slab = _weight_slab(w2f, C_out, C_mid_p, cdt)      # (C_out,   3*C_mid_p)
    b1c = jnp.zeros((C_mid_p, 1), jnp.float32).at[:C_mid, 0].set(b1)
    b2c = b2[:, None].astype(jnp.float32)

    # ---- VMEM-budget-aware lane-block selection (prefer >=2 grid steps: v7x 2 TCs).
    def ws_bytes(lanes):
        x_b = C_in_p * lanes * itemsize
        m_b = 2 * lanes * itemsize
        o_b = C_out * lanes * out_itemsize
        w_b = (C_mid_p * 3 * C_in_p + C_out * 3 * C_mid_p) * itemsize \
              + (C_mid_p + C_out) * 4
        scratch = 3 * (C_in_p + C_mid_p) * lanes * itemsize
        live_f32 = (C_mid_p + C_out) * lanes * 4            # matmul results / ReLU temps
        return 2 * (x_b + m_b + o_b + w_b) + scratch + live_f32

    nl = N * L
    cands = [b * L for b in range(1, N) if N % b == 0 and (b * L) % 128 == 0]
    fitting = [l for l in cands if ws_bytes(l) <= vmem_budget]
    if fitting:
        blk_lanes = max(fitting)          # largest block that fits -> amortize grid-step overhead
    elif cands:
        blk_lanes = min(cands)            # best effort under budget pressure
    else:
        # TODO(synk): add an L-tiling grid axis (with 1-column halos) so the
        # N==1 / long-L regime doesn't force one huge block (VMEM pressure and
        # an idle second TensorCore on v7x).
        blk_lanes = _round_up(nl, 128)
    nl_pad = _round_up(nl, blk_lanes)
    num_blocks = nl_pad // blk_lanes

    # ---- slab layout + host-precomputed boundary keep-masks.
    # (For chained DoubleConv blocks keep activations in this (C, N*L) layout
    #  and skip these transposes: they are an extra HBM round trip that exists
    #  only for torch-layout parity.)
    x_slab = jnp.transpose(x, (1, 0, 2)).reshape(C_in, nl)
    x_slab = jnp.pad(x_slab, ((0, C_in_p - C_in), (0, nl_pad - nl))).astype(cdt)
    pos = jnp.arange(nl_pad, dtype=jnp.int32) % L
    keep_first = (pos != 0).astype(cdt)[None, :]           # (1, nl_pad)
    keep_last = (pos != L - 1).astype(cdt)[None, :]

    need = ws_bytes(blk_lanes)
    vmem_limit = int(min(max(need * 1.3, 16 * 1024 * 1024), 112 * 1024 * 1024))

    flops = 2 * 3 * (C_in_p * C_mid_p + C_mid_p * C_out) * nl_pad
    bytes_accessed = ((C_in_p + 2) * nl_pad
                      + 3 * (C_mid_p * C_in_p + C_out * C_mid_p)) * itemsize \
                     + C_out * nl_pad * out_itemsize + (C_mid_p + C_out) * 4

    y_slab = pl.pallas_call(
        _double_conv_kernel,
        out_shape=jax.ShapeDtypeStruct((C_out, nl_pad), out_dtype),
        grid_spec=pltpu.PrefetchScalarGridSpec(
            num_scalar_prefetch=0,
            grid=(num_blocks,),
            in_specs=[
                pl.BlockSpec((1, blk_lanes), lambda g: (0, g)),          # keep_first
                pl.BlockSpec((1, blk_lanes), lambda g: (0, g)),          # keep_last
                pl.BlockSpec((C_in_p, blk_lanes), lambda g: (0, g)),     # x slab
                pl.BlockSpec((C_mid_p, 3 * C_in_p), lambda g: (0, 0)),   # w1 slab (resident)
                pl.BlockSpec((C_mid_p, 1), lambda g: (0, 0)),            # b1
                pl.BlockSpec((C_out, 3 * C_mid_p), lambda g: (0, 0)),    # w2 slab (resident)
                pl.BlockSpec((C_out, 1), lambda g: (0, 0)),              # b2
            ],
            out_specs=pl.BlockSpec((C_out, blk_lanes), lambda g: (0, g)),
            scratch_shapes=[
                pltpu.VMEM((3 * C_in_p, blk_lanes), cdt),    # stacked conv1 operand
                pltpu.VMEM((3 * C_mid_p, blk_lanes), cdt),   # h + shifted h (conv2 operand)
            ]),
        compiler_params=pltpu.CompilerParams(
            dimension_semantics=("parallel",),
            vmem_limit_bytes=vmem_limit),
        cost_estimate=pl.CostEstimate(
            flops=flops, transcendentals=0, bytes_accessed=bytes_accessed),
    )(keep_first, keep_last, x_slab, w1_slab, b1c, w2_slab, b2c)

    # (C_out, N*L) -> (N, C_out, L)
    y = y_slab[:, :nl].reshape(C_out, N, L)
    return jnp.transpose(y, (1, 0, 2))


def reference_double_conv(x, w1, cb1, g1, be1, m1, v1, w2, cb2, g2, be2, m2, v2,
                          eps=1e-5):
    """Plain-JAX reference (lax.conv), eval-mode BN."""
    def conv1d(x, w, b):
        y = lax.conv_general_dilated(
            x, w, window_strides=(1,), padding=((1, 1),),
            dimension_numbers=("NCH", "OIH", "NCH"))
        return y + b[None, :, None]

    def bn(x, g, be, m, v):
        return (x - m[None, :, None]) / jnp.sqrt(v[None, :, None] + eps) \
               * g[None, :, None] + be[None, :, None]

    h = jax.nn.relu(bn(conv1d(x, w1, cb1), g1, be1, m1, v1))
    return jax.nn.relu(bn(conv1d(h, w2, cb2), g2, be2, m2, v2))


if __name__ == "__main__":
    def make_params(key, C_in, C_mid, C_out):
        ks = jax.random.split(key, 12)
        w1 = 0.2 * jax.random.normal(ks[0], (C_mid, C_in, KSIZE), jnp.float32)
        cb1 = 0.1 * jax.random.normal(ks[1], (C_mid,), jnp.float32)
        g1 = 1.0 + 0.1 * jax.random.normal(ks[2], (C_mid,), jnp.float32)
        be1 = 0.1 * jax.random.normal(ks[3], (C_mid,), jnp.float32)
        m1 = 0.05 * jax.random.normal(ks[4], (C_mid,), jnp.float32)
        v1 = 1.0 + 0.1 * jnp.abs(jax.random.normal(ks[5], (C_mid,), jnp.float32))
        w2 = 0.2 * jax.random.normal(ks[6], (C_out, C_mid, KSIZE), jnp.float32)
        cb2 = 0.1 * jax.random.normal(ks[7], (C_out,), jnp.float32)
        g2 = 1.0 + 0.1 * jax.random.normal(ks[8], (C_out,), jnp.float32)
        be2 = 0.1 * jax.random.normal(ks[9], (C_out,), jnp.float32)
        m2 = 0.05 * jax.random.normal(ks[10], (C_out,), jnp.float32)
        v2 = 1.0 + 0.1 * jnp.abs(jax.random.normal(ks[11], (C_out,), jnp.float32))
        return (w1, cb1, g1, be1, m1, v1, w2, cb2, g2, be2, m2, v2)

    key = jax.random.PRNGKey(0)
    configs = [
        # (N, C_in, C_out, L) with C_mid = C_out (module default)
        (2, 4, 8, 16),    # tiny: single lane-padded block
        (4, 6, 10, 64),   # multi-block grid (2 parallel steps) + channel padding
    ]
    for idx, (N, C_in, C_out, L) in enumerate(configs):
        kx, kp, key = jax.random.split(key, 3)
        x = jax.random.normal(kx, (N, C_in, L), dtype=jnp.float32)
        params = make_params(kp, C_in, C_out, C_out)

        ref = jax.block_until_ready(reference_double_conv(x, *params))

        # exact f32 path
        out_f32 = jax.block_until_ready(
            double_conv_pallas(x, *params, use_bf16=False))
        assert out_f32.shape == (N, C_out, L)
        assert jnp.allclose(out_f32, ref, atol=1e-3, rtol=1e-3), \
            f"cfg{idx} f32 max abs err {jnp.max(jnp.abs(out_f32 - ref))}"

        # default path: bf16 MXU operands, f32 accumulation (double rounding ->
        # looser tolerance, expected).
        out_bf16 = jax.block_until_ready(double_conv_pallas(x, *params))
        assert jnp.allclose(out_bf16, ref, atol=7e-2, rtol=7e-2), \
            f"cfg{idx} bf16 max abs err {jnp.max(jnp.abs(out_bf16 - ref))}"

    print("KERNEL_OK")
</pallas_src>

<mosaic_0001>
module attributes {stable_mosaic.version = 11 : i64} {
  func.func @_double_conv_kernel(%arg0: i32, %arg1: memref<1x128xf32, #tpu.memory_space<vmem>>, %arg2: memref<1x128xf32, #tpu.memory_space<vmem>>, %arg3: memref<8x128xf32, #tpu.memory_space<vmem>>, %arg4: memref<8x24xf32, #tpu.memory_space<vmem>>, %arg5: memref<8x1xf32, #tpu.memory_space<vmem>>, %arg6: memref<8x24xf32, #tpu.memory_space<vmem>>, %arg7: memref<8x1xf32, #tpu.memory_space<vmem>>, %arg8: memref<8x128xf32, #tpu.memory_space<vmem>>, %arg9: memref<24x128xf32, #tpu.memory_space<vmem>>, %arg10: memref<24x128xf32, #tpu.memory_space<vmem>>) attributes {dimension_semantics = [#tpu.dimension_semantics<parallel>], iteration_bounds = array<i64: 1>, scalar_prefetch = 0 : i64, scratch_operands = 2 : i64, tpu.core_type = #tpu.core_type<tc>, window_params = [{transform_indices = @transform_0, window_bounds = array<i64: 1, 128>}, {transform_indices = @transform_1, window_bounds = array<i64: 1, 128>}, {transform_indices = @transform_2, window_bounds = array<i64: 8, 128>}, {pipeline_mode = #tpu.pipeline_mode<synchronous>, transform_indices = @transform_3, window_bounds = array<i64: 8, 24>}, {pipeline_mode = #tpu.pipeline_mode<synchronous>, transform_indices = @transform_4, window_bounds = array<i64: 8, 1>}, {pipeline_mode = #tpu.pipeline_mode<synchronous>, transform_indices = @transform_5, window_bounds = array<i64: 8, 24>}, {pipeline_mode = #tpu.pipeline_mode<synchronous>, transform_indices = @transform_6, window_bounds = array<i64: 8, 1>}, {transform_indices = @transform_7, window_bounds = array<i64: 8, 128>}]} {
    %c0 = arith.constant 0 : index
    %c0_0 = arith.constant 0 : index
    %0 = vector.load %arg1[%c0, %c0_0] : memref<1x128xf32, #tpu.memory_space<vmem>>, vector<1x128xf32>
    %c0_1 = arith.constant 0 : index
    %c0_2 = arith.constant 0 : index
    %1 = vector.load %arg2[%c0_1, %c0_2] : memref<1x128xf32, #tpu.memory_space<vmem>>, vector<1x128xf32>
    %c0_3 = arith.constant 0 : index
    %c0_4 = arith.constant 0 : index
    %2 = vector.load %arg3[%c0_3, %c0_4] : memref<8x128xf32, #tpu.memory_space<vmem>>, vector<8x128xf32>
    %c1_i32 = arith.constant 1 : i32
    %3 = tpu.dynamic_rotate %2 by %c1_i32 dim 1 : vector<8x128xf32>, i32 -> vector<8x128xf32>
    %4 = vector.broadcast %0 : vector<1x128xf32> to vector<8x128xf32>
    %5 = arith.mulf %3, %4 : vector<8x128xf32>
    %c0_5 = arith.constant 0 : index
    %c0_6 = arith.constant 0 : index
    %6 = vector.load %arg9[%c0_5, %c0_6] : memref<24x128xf32, #tpu.memory_space<vmem>>, vector<8x128xf32>
    tpu.vector_store %arg9[%c0_5, %c0_6], %5 {strides = array<i32>} : memref<24x128xf32, #tpu.memory_space<vmem>>, vector<8x128xf32>,
    %c8 = arith.constant 8 : index
    %c0_7 = arith.constant 0 : index
    %7 = vector.load %arg9[%c8, %c0_7] : memref<24x128xf32, #tpu.memory_space<vmem>>, vector<8x128xf32>
    tpu.vector_store %arg9[%c8, %c0_7], %2 {strides = array<i32>} : memref<24x128xf32, #tpu.memory_space<vmem>>, vector<8x128xf32>,
    %c127_i32 = arith.constant 127 : i32
    %8 = tpu.dynamic_rotate %2 by %c127_i32 dim 1 : vector<8x128xf32>, i32 -> vector<8x128xf32>
    %9 = vector.broadcast %1 : vector<1x128xf32> to vector<8x128xf32>
    %10 = arith.mulf %8, %9 : vector<8x128xf32>
    %c16 = arith.constant 16 : index
    %c0_8 = arith.constant 0 : index
    %11 = vector.load %arg9[%c16, %c0_8] : memref<24x128xf32, #tpu.memory_space<vmem>>, vector<8x128xf32>
    tpu.vector_store %arg9[%c16, %c0_8], %10 {strides = array<i32>} : memref<24x128xf32, #tpu.memory_space<vmem>>, vector<8x128xf32>,
    %c0_9 = arith.constant 0 : index
    %c0_10 = arith.constant 0 : index
    %12 = vector.load %arg4[%c0_9, %c0_10] : memref<8x24xf32, #tpu.memory_space<vmem>>, vector<8x24xf32>
    %c0_11 = arith.constant 0 : index
    %c0_12 = arith.constant 0 : index
    %13 = vector.load %arg9[%c0_11, %c0_12] : memref<24x128xf32, #tpu.memory_space<vmem>>, vector<24x128xf32>
    %cst = arith.constant dense<0.000000e+00> : vector<8x128xf32>
    %14 = tpu.matmul %12, %13, %cst {dimension_numbers = #tpu.dot_dimension_numbers<[1], [0], [0], [1], [0, 0, 1, 1], [], []>} : vector<8x24xf32>, vector<24x128xf32>, vector<8x128xf32> -> vector<8x128xf32>
    %c0_13 = arith.constant 0 : index
    %c0_14 = arith.constant 0 : index
    %15 = vector.load %arg5[%c0_13, %c0_14] : memref<8x1xf32, #tpu.memory_space<vmem>>, vector<8x1xf32>
    %16 = vector.broadcast %15 : vector<8x1xf32> to vector<8x128xf32>
    %17 = arith.addf %14, %16 : vector<8x128xf32>
    %cst_15 = arith.constant 0.000000e+00 : f32
    %18 = vector.broadcast %cst_15 : f32 to vector<8x128xf32>
    %19 = arith.maximumf %17, %18 : vector<8x128xf32>
    %c8_16 = arith.constant 8 : index
    %c0_17 = arith.constant 0 : index
    %20 = vector.load %arg10[%c8_16, %c0_17] : memref<24x128xf32, #tpu.memory_space<vmem>>, vector<8x128xf32>
    tpu.vector_store %arg10[%c8_16, %c0_17], %19 {strides = array<i32>} : memref<24x128xf32, #tpu.memory_space<vmem>>, vector<8x128xf32>,
    %c8_18 = arith.constant 8 : index
    %c0_19 = arith.constant 0 : index
    %21 = vector.load %arg10[%c8_18, %c0_19] : memref<24x128xf32, #tpu.memory_space<vmem>>, vector<8x128xf32>
    %c1_i32_20 = arith.constant 1 : i32
    %22 = tpu.dynamic_rotate %21 by %c1_i32_20 dim 1 : vector<8x128xf32>, i32 -> vector<8x128xf32>
    %23 = vector.broadcast %0 : vector<1x128xf32> to vector<8x128xf32>
    %24 = arith.mulf %22, %23 : vector<8x128xf32>
    %c0_21 = arith.constant 0 : index
    %c0_22 = arith.constant 0 : index
    %25 = vector.load %arg10[%c0_21, %c0_22] : memref<24x128xf32, #tpu.memory_space<vmem>>, vector<8x128xf32>
    tpu.vector_store %arg10[%c0_21, %c0_22], %24 {strides = array<i32>} : memref<24x128xf32, #tpu.memory_space<vmem>>, vector<8x128xf32>,
    %c127_i32_23 = arith.constant 127 : i32
    %26 = tpu.dynamic_rotate %21 by %c127_i32_23 dim 1 : vector<8x128xf32>, i32 -> vector<8x128xf32>
    %27 = vector.broadcast %1 : vector<1x128xf32> to vector<8x128xf32>
    %28 = arith.mulf %26, %27 : vector<8x128xf32>
    %c16_24 = arith.constant 16 : index
    %c0_25 = arith.constant 0 : index
    %29 = vector.load %arg10[%c16_24, %c0_25] : memref<24x128xf32, #tpu.memory_space<vmem>>, vector<8x128xf32>
    tpu.vector_store %arg10[%c16_24, %c0_25], %28 {strides = array<i32>} : memref<24x128xf32, #tpu.memory_space<vmem>>, vector<8x128xf32>,
    %c0_26 = arith.constant 0 : index
    %c0_27 = arith.constant 0 : index
    %30 = vector.load %arg6[%c0_26, %c0_27] : memref<8x24xf32, #tpu.memory_space<vmem>>, vector<8x24xf32>
    %c0_28 = arith.constant 0 : index
    %c0_29 = arith.constant 0 : index
    %31 = vector.load %arg10[%c0_28, %c0_29] : memref<24x128xf32, #tpu.memory_space<vmem>>, vector<24x128xf32>
    %cst_30 = arith.constant dense<0.000000e+00> : vector<8x128xf32>
    %32 = tpu.matmul %30, %31, %cst_30 {dimension_numbers = #tpu.dot_dimension_numbers<[1], [0], [0], [1], [0, 0, 1, 1], [], []>} : vector<8x24xf32>, vector<24x128xf32>, vector<8x128xf32> -> vector<8x128xf32>
    %c0_31 = arith.constant 0 : index
    %c0_32 = arith.constant 0 : index
    %33 = vector.load %arg7[%c0_31, %c0_32] : memref<8x1xf32, #tpu.memory_space<vmem>>, vector<8x1xf32>
    %34 = vector.broadcast %33 : vector<8x1xf32> to vector<8x128xf32>
    %35 = arith.addf %32, %34 : vector<8x128xf32>
    %cst_33 = arith.constant 0.000000e+00 : f32
    %36 = vector.broadcast %cst_33 : f32 to vector<8x128xf32>
    %37 = arith.maximumf %35, %36 : vector<8x128xf32>
    %c0_34 = arith.constant 0 : index
    %c0_35 = arith.constant 0 : index
    %38 = vector.load %arg8[%c0_34, %c0_35] : memref<8x128xf32, #tpu.memory_space<vmem>>, vector<8x128xf32>
    tpu.vector_store %arg8[%c0_34, %c0_35], %37 {strides = array<i32>} : memref<8x128xf32, #tpu.memory_space<vmem>>, vector<8x128xf32>,
    return
  }
  func.func @transform_0(%arg0: i32) -> (i32, i32) {
    %c0_i32 = arith.constant 0 : i32
    %c0_i32_0 = arith.constant 0 : i32
    return %c0_i32, %arg0 : i32, i32
  }
  func.func @transform_1(%arg0: i32) -> (i32, i32) {
    %c0_i32 = arith.constant 0 : i32
    %c0_i32_0 = arith.constant 0 : i32
    return %c0_i32, %arg0 : i32, i32
  }
  func.func @transform_2(%arg0: i32) -> (i32, i32) {
    %c0_i32 = arith.constant 0 : i32
    %c0_i32_0 = arith.constant 0 : i32
    return %c0_i32, %arg0 : i32, i32
  }
  func.func @transform_3(%arg0: i32) -> (i32, i32) {
    %c0_i32 = arith.constant 0 : i32
    %c0_i32_0 = arith.constant 0 : i32
    %c0_i32_1 = arith.constant 0 : i32
    return %c0_i32, %c0_i32_0 : i32, i32
  }
  func.func @transform_4(%arg0: i32) -> (i32, i32) {
    %c0_i32 = arith.constant 0 : i32
    %c0_i32_0 = arith.constant 0 : i32
    %c0_i32_1 = arith.constant 0 : i32
    return %c0_i32, %c0_i32_0 : i32, i32
  }
  func.func @transform_5(%arg0: i32) -> (i32, i32) {
    %c0_i32 = arith.constant 0 : i32
    %c0_i32_0 = arith.constant 0 : i32
    %c0_i32_1 = arith.constant 0 : i32
    return %c0_i32, %c0_i32_0 : i32, i32
  }
  func.func @transform_6(%arg0: i32) -> (i32, i32) {
    %c0_i32 = arith.constant 0 : i32
    %c0_i32_0 = arith.constant 0 : i32
    %c0_i32_1 = arith.constant 0 : i32
    return %c0_i32, %c0_i32_0 : i32, i32
  }
  func.func @transform_7(%arg0: i32) -> (i32, i32) {
    %c0_i32 = arith.constant 0 : i32
    %c0_i32_0 = arith.constant 0 : i32
    return %c0_i32, %arg0 : i32, i32
  }
}

</mosaic_0001>

<llo_original>
// kernel: tpu_custom_call.1
$region0: #{tpu_custom_call.1}
  #allocation0 [shape = 'u32[]', space=smem, size = 0x4, offset = 0x4, fixed_abs, tag = 'smem constant byte address 0x4 - core index']
  #allocation1 [shape = 'u32[144,128]{1,0:T(1,128)}', space=vmem, size = 0x12000, scoped, tag = 'internal scratch']
  #allocation2 [shape = 'f32[24,128]{1,0:T(8,128)}', space=vmem, size = 0x3000, scoped, tag = 'scratch operand']
  #allocation3 [shape = 'f32[24,128]{1,0:T(8,128)}', space=vmem, size = 0x3000, scoped, tag = 'scratch operand']
  %s0 = inlined_call_operand.hbm [shape: f32[1,128], index: 0, kind: input, shape index: {}]
  %s1 = inlined_call_operand.hbm [shape: f32[1,128], index: 1, kind: input, shape index: {}]
  %s2 = inlined_call_operand.vmem [shape: f32[8,128], index: 2, kind: input, shape index: {}]
  %s3 = inlined_call_operand.vmem [shape: f32[8,24], index: 3, kind: input, shape index: {}]
  %s4 = inlined_call_operand.vmem [shape: f32[8,1], index: 4, kind: input, shape index: {}]
  %s5 = inlined_call_operand.vmem [shape: f32[8,24], index: 5, kind: input, shape index: {}]
  %s6 = inlined_call_operand.vmem [shape: f32[8,1], index: 6, kind: input, shape index: {}]
  %s7 = inlined_call_operand.hbm [shape: f32[8,128], index: 7, kind: output, shape index: {}]
  %s8 = sld [smem:[#allocation0]]
  $region46: #{tpu_custom_call.1} parent=0
    _
  %s10 = ssub.s32 1, %s8
  %s11 = scalar_select 0, %s10, %s8
  $region1: #{tpu_custom_call.1} parent=0
    #allocation4 [shape = 'u8[512]{0}', space=vmem, size = 0x400, scoped, tag = 'input window, operand 0, single buffered']
    #allocation5 [shape = 's32[1]{0}', space=sflag, size = 0x4, scoped, tag = 'scoped memory for tpu_custom_call.1']
    #allocation6 [shape = 's32[1]{0}', space=sflag, size = 0x4, scoped, tag = 'scoped memory for tpu_custom_call.1']
    #allocation7 [shape = 'u8[512]{0}', space=vmem, size = 0x400, scoped, tag = 'input window, operand 1, single buffered']
    #allocation8 [shape = 's32[1]{0}', space=sflag, size = 0x4, scoped, tag = 'scoped memory for tpu_custom_call.1']
    #allocation9 [shape = 'u8[4096]{0}', space=vmem, size = 0x1000, scoped, tag = 'output window, operand 0, single buffered']
    %12 = vsyncpa [#allocation5], 0
    %13 = vsyncpa [#allocation8], 0
    %14 = vsyncpa [#allocation6], 0
    // Predicated region
    $region2: #{tpu_custom_call.1} parent=1 // pred_check
      _
    $region3: #{tpu_custom_call.1} parent=1 // pred_check_branch
      %16 = sbr.rel (0) target = $region5
    $region4: #{tpu_custom_call.1} parent=1 // pred_region
      %s18 = ssub.s32 16, 16
      %19 = vsyncadd [#allocation5], %s18
      %s21 = sshll.u32 [#allocation4], 4
      %s22 = int_to_ptr.vmem [resolvable:$true] %s21
      %24 = dma.hbm_to_vmem [thread:$0]  %s0, 16, %s22, [#allocation5]
    $region5: #{tpu_custom_call.1} parent=1 // pred_fallthru
      _
    // Predicated region
    $region6: #{tpu_custom_call.1} parent=1 // pred_check
      _
    $region7: #{tpu_custom_call.1} parent=1 // pred_check_branch
      %26 = sbr.rel (0) target = $region9
    $region8: #{tpu_custom_call.1} parent=1 // pred_region
      %s28 = ssub.s32 16, 16
      %29 = vsyncadd [#allocation8], %s28
      %s31 = sshll.u32 [#allocation7], 4
      %s32 = int_to_ptr.vmem [resolvable:$true] %s31
      %34 = dma.hbm_to_vmem [thread:$0]  %s1, 16, %s32, [#allocation8]
    $region9: #{tpu_custom_call.1} parent=1 // pred_fallthru
      _
    // Predicated region
    $region10: #{tpu_custom_call.1} parent=1 // pred_check
      _
    $region11: #{tpu_custom_call.1} parent=1 // pred_check_branch
      %36 = sbr.rel (0) target = $region13
    $region12: #{tpu_custom_call.1} parent=1 // pred_region
      _
    $region13: #{tpu_custom_call.1} parent=1 // pred_fallthru
      _
    // Predicated region
    $region14: #{tpu_custom_call.1} parent=1 // pred_check
      _
    $region15: #{tpu_custom_call.1} parent=1 // pred_check_branch
      %38 = sbr.rel (0) target = $region17
    $region16: #{tpu_custom_call.1} parent=1 // pred_region
      _
    $region17: #{tpu_custom_call.1} parent=1 // pred_fallthru
      _
    // Predicated region
    $region18: #{tpu_custom_call.1} parent=1 // pred_check
      _
    $region19: #{tpu_custom_call.1} parent=1 // pred_check_branch
      %40 = sbr.rel (0) target = $region21
    $region20: #{tpu_custom_call.1} parent=1 // pred_region
      _
    $region21: #{tpu_custom_call.1} parent=1 // pred_fallthru
      _
    // Predicated region
    $region22: #{tpu_custom_call.1} parent=1 // pred_check
      _
    $region23: #{tpu_custom_call.1} parent=1 // pred_check_branch
      %42 = sbr.rel (0) target = $region25
    $region24: #{tpu_custom_call.1} parent=1 // pred_region
      _
    $region25: #{tpu_custom_call.1} parent=1 // pred_fallthru
      _
    // Predicated region
    $region26: #{tpu_custom_call.1} parent=1 // pred_check
      _
    $region27: #{tpu_custom_call.1} parent=1 // pred_check_branch
      %44 = sbr.rel (0) target = $region29
    $region28: #{tpu_custom_call.1} parent=1 // pred_region
      _
    $region29: #{tpu_custom_call.1} parent=1 // pred_fallthru
      _
    // Predicated region
    $region30: #{tpu_custom_call.1} parent=1 // pred_check
      _
    $region31: #{tpu_custom_call.1} parent=1 // pred_check_branch
      %46 = sbr.rel (0) target = $region33
    $region32: #{tpu_custom_call.1} parent=1 // pred_region
      %47 = dma.done [#allocation5], 16
    $region33: #{tpu_custom_call.1} parent=1 // pred_fallthru
      _
    // Predicated region
    $region34: #{tpu_custom_call.1} parent=1 // pred_check
      _
    $region35: #{tpu_custom_call.1} parent=1 // pred_check_branch
      %49 = sbr.rel (0) target = $region37
    $region36: #{tpu_custom_call.1} parent=1 // pred_region
      %50 = dma.done [#allocation8], 16
    $region37: #{tpu_custom_call.1} parent=1 // pred_fallthru
      _
    %v51 = vld [vmem:[#allocation4] sm:$0x1]
    %v52 = vld [vmem:[#allocation7] sm:$0x1]
    %v53 = vld [vmem:[%s2] sm:$0xff]
    %54 = vrot.lane.b32.xlu0 %v53, 1
    %v55 = vpop.permute.xlu0 %54
    %v57 = vlaneseq
    %v58 = vshrl.u32 %v57, 7
    %v59 = vsub.s32 0, %v58
    %v60 = vrot.slane %v51, %v59
    %v62 = vmul.f32 %v55, %v60
    %63 = vst [vmem:[#allocation2] sm:$0xff] %v62
    %64 = vst [vmem:[#allocation2 + $0x8] sm:$0xff] %v53
    %65 = vrot.lane.b32.xlu0 %v53, 127
    %v66 = vpop.permute.xlu0 %65
    %v68 = vlaneseq
    %v69 = vshrl.u32 %v68, 7
    %v70 = vsub.s32 0, %v69
    %v71 = vrot.slane %v52, %v70
    %v73 = vmul.f32 %v66, %v71
    %74 = vst [vmem:[#allocation2 + $0x10] sm:$0xff] %v73
    %v75 = vld [vmem:[%s3] sm:$0xff]
    %v76 = vld [vmem:[#allocation2] sm:$0xff]
    %v77 = vld [vmem:[#allocation2 + $0x8] sm:$0xff]
    %v78 = vld [vmem:[#allocation2 + $0x10] sm:$0xff]
    %v79 = vld [vmem:[%s4] sm:$0xff]
    %81 = vset.pattern.permute.xlu0 0
    %82 = vperm.xlu0 %81, %v79
    %v83 = vpop.permute.xlu0 %82
    %vm85 = vcmask 195584
    %v87 = vsel %vm85, %v75, 0
    %89 = vmatprep.subr.mxu0 0.0
    %90 = vmatpush1.msra.mxu0 %v76
    %91 = vmatprep.subr.mxu0 0.0
    %92 = vmatpush1.msra.mxu0 %v77
    %93 = vmatprep.subr.mxu0 0.0
    %94 = vmatpush1.msra.mxu0 %v78
    %95 = vmatprep.subr.mxu0 0.0
    %96 = vmatpush1.msra.mxu0 0.0
    %97 = vmatprep.subr.mxu0 0.0
    %98 = vmatpush1.msra.mxu0 0.0
    %99 = vmatprep.subr.mxu0 0.0
    %100 = vmatpush1.msra.mxu0 0.0
    %101 = vmatprep.subr.mxu0 0.0
    %102 = vmatpush1.msra.mxu0 0.0
    %103 = vmatprep.subr.mxu0 0.0
    %104 = vmatpush1.msra.mxu0 0.0
    %105 = vmatprep.subr.mxu0 0.0
    %106 = vmatpush1.msra.mxu0 0.0
    %107 = vmatprep.subr.mxu0 0.0
    %108 = vmatpush1.msra.mxu0 0.0
    %109 = vmatprep.subr.mxu0 0.0
    %110 = vmatpush1.msra.mxu0 0.0
    %111 = vmatprep.subr.mxu0 0.0
    %112 = vmatpush1.msra.mxu0 0.0
    %113 = vmatprep.subr.mxu0 0.0
    %114 = vmatpush1.msra.mxu0 0.0
    %115 = vmatprep.subr.mxu0 0.0
    %116 = vmatpush1.msra.mxu0 0.0
    %117 = vmatprep.subr.mxu0 0.0
    %118 = vmatpush1.msra.mxu0 0.0
    %119 = vmatprep.subr.mxu0 0.0
    %120 = vmatpush1.msra.mxu0 0.0
    %121 = vmatprep.subr.mxu0 0.0
    %122 = vmatpush1.msra.mxu0 0.0
    %123 = vmatprep.subr.mxu0 0.0
    %124 = vmatpush1.msra.mxu0 0.0
    %125 = vmatprep.subr.mxu0 0.0
    %126 = vmatpush1.msra.mxu0 0.0
    %127 = vmatprep.subr.mxu0 0.0
    %128 = vmatpush1.msra.mxu0 0.0
    %129 = vmatprep.subr.mxu0 0.0
    %130 = vmatpush1.msra.mxu0 0.0
    %131 = vmatprep.subr.mxu0 0.0
    %132 = vmatpush1.msra.mxu0 0.0
    %133 = vmatprep.subr.mxu0 0.0
    %134 = vmatpush1.msra.mxu0 0.0
    %135 = vmatprep.subr.mxu0 0.0
    %136 = vmatpush1.msra.mxu0 0.0
    %137 = vmatprep.subr.mxu0 0.0
    %138 = vmatpush1.msra.mxu0 0.0
    %139 = vmatprep.subr.mxu0 0.0
    %140 = vmatpush1.msra.mxu0 0.0
    %141 = vmatprep.subr.mxu0 0.0
    %142 = vmatpush1.msra.mxu0 0.0
    %143 = vmatprep.subr.mxu0 0.0
    %144 = vmatpush1.msra.mxu0 0.0
    %145 = vmatprep.subr.mxu0 0.0
    %146 = vmatpush1.msra.mxu0 0.0
    %147 = vmatprep.subr.mxu0 0.0
    %148 = vmatpush1.msra.mxu0 0.0
    %149 = vmatprep.subr.mxu0 0.0
    %150 = vmatpush1.msra.mxu0 0.0
    %151 = vmatprep.subr.mxu0 0.0
    %152 = vmatpush1.msra.mxu0 0.0
    %153 = vmatprep.mubr.f32.mxu0 0.0
    %154 = vmatmul.mubr.f32.gmra.mrb[0].mxu0 %v87
    %v155 = vpop.f32.mrb[0].mxu0
    %v156 = vadd.f32 %v83, %v155
    %v157 = vpop.f32.mrb[0].mxu0
    %158 = vdwg.mxu0
    %v159 = vmax.f32 %v156, 0.0
    %160 = vst [vmem:[#allocation3 + $0x8] sm:$0xff] %v159
    %v161 = vld [vmem:[#allocation3 + $0x8] sm:$0xff]
    %162 = vrot.lane.b32.xlu0 %v161, 1
    %v163 = vpop.permute.xlu0 %162
    %v164 = vmul.f32 %v163, %v60
    %165 = vst [vmem:[#allocation3] sm:$0xff] %v164
    %166 = vrot.lane.b32.xlu0 %v161, 127
    %v167 = vpop.permute.xlu0 %166
    %v168 = vmul.f32 %v167, %v71
    %169 = vst [vmem:[#allocation3 + $0x10] sm:$0xff] %v168
    %v170 = vld [vmem:[%s5] sm:$0xff]
    %v171 = vld [vmem:[#allocation3] sm:$0xff]
    %v172 = vld [vmem:[#allocation3 + $0x8] sm:$0xff]
    %v173 = vld [vmem:[#allocation3 + $0x10] sm:$0xff]
    %v174 = vld [vmem:[%s6] sm:$0xff]
    %176 = vset.pattern.permute.xlu0 0
    %177 = vperm.xlu0 %176, %v174
    %v178 = vpop.permute.xlu0 %177
    %v181 = vsel %vm85, %v170, 0
    %183 = vmatprep.subr.mxu0 0.0
    %184 = vmatpush1.msra.mxu0 %v171
    %185 = vmatprep.subr.mxu0 0.0
    %186 = vmatpush1.msra.mxu0 %v172
    %187 = vmatprep.subr.mxu0 0.0
    %188 = vmatpush1.msra.mxu0 %v173
    %189 = vmatprep.subr.mxu0 0.0
    %190 = vmatpush1.msra.mxu0 0.0
    %191 = vmatprep.subr.mxu0 0.0
    %192 = vmatpush1.msra.mxu0 0.0
    %193 = vmatprep.subr.mxu0 0.0
    %194 = vmatpush1.msra.mxu0 0.0
    %195 = vmatprep.subr.mxu0 0.0
    %196 = vmatpush1.msra.mxu0 0.0
    %197 = vmatprep.subr.mxu0 0.0
    %198 = vmatpush1.msra.mxu0 0.0
    %199 = vmatprep.subr.mxu0 0.0
    %200 = vmatpush1.msra.mxu0 0.0
    %201 = vmatprep.subr.mxu0 0.0
    %202 = vmatpush1.msra.mxu0 0.0
    %203 = vmatprep.subr.mxu0 0.0
    %204 = vmatpush1.msra.mxu0 0.0
    %205 = vmatprep.subr.mxu0 0.0
    %206 = vmatpush1.msra.mxu0 0.0
    %207 = vmatprep.subr.mxu0 0.0
    %208 = vmatpush1.msra.mxu0 0.0
    %209 = vmatprep.subr.mxu0 0.0
    %210 = vmatpush1.msra.mxu0 0.0
    %211 = vmatprep.subr.mxu0 0.0
    %212 = vmatpush1.msra.mxu0 0.0
    %213 = vmatprep.subr.mxu0 0.0
    %214 = vmatpush1.msra.mxu0 0.0
    %215 = vmatprep.subr.mxu0 0.0
    %216 = vmatpush1.msra.mxu0 0.0
    %217 = vmatprep.subr.mxu0 0.0
    %218 = vmatpush1.msra.mxu0 0.0
    %219 = vmatprep.subr.mxu0 0.0
    %220 = vmatpush1.msra.mxu0 0.0
    %221 = vmatprep.subr.mxu0 0.0
    %222 = vmatpush1.msra.mxu0 0.0
    %223 = vmatprep.subr.mxu0 0.0
    %224 = vmatpush1.msra.mxu0 0.0
    %225 = vmatprep.subr.mxu0 0.0
    %226 = vmatpush1.msra.mxu0 0.0
    %227 = vmatprep.subr.mxu0 0.0
    %228 = vmatpush1.msra.mxu0 0.0
    %229 = vmatprep.subr.mxu0 0.0
    %230 = vmatpush1.msra.mxu0 0.0
    %231 = vmatprep.subr.mxu0 0.0
    %232 = vmatpush1.msra.mxu0 0.0
    %233 = vmatprep.subr.mxu0 0.0
    %234 = vmatpush1.msra.mxu0 0.0
    %235 = vmatprep.subr.mxu0 0.0
    %236 = vmatpush1.msra.mxu0 0.0
    %237 = vmatprep.subr.mxu0 0.0
    %238 = vmatpush1.msra.mxu0 0.0
    %239 = vmatprep.subr.mxu0 0.0
    %240 = vmatpush1.msra.mxu0 0.0
    %241 = vmatprep.subr.mxu0 0.0
    %242 = vmatpush1.msra.mxu0 0.0
    %243 = vmatprep.subr.mxu0 0.0
    %244 = vmatpush1.msra.mxu0 0.0
    %245 = vmatprep.subr.mxu0 0.0
    %246 = vmatpush1.msra.mxu0 0.0
    %247 = vmatprep.mubr.f32.mxu0 0.0
    %248 = vmatmul.mubr.f32.gmra.mrb[0].mxu0 %v181
    %v249 = vpop.f32.mrb[0].mxu0
    %v250 = vadd.f32 %v178, %v249
    %v251 = vpop.f32.mrb[0].mxu0
    %252 = vdwg.mxu0
    %v253 = vmax.f32 %v250, 0.0
    %254 = vst [vmem:[#allocation9] sm:$0xff] %v253
    // Predicated region
    $region38: #{tpu_custom_call.1} parent=1 // pred_check
      _
    $region39: #{tpu_custom_call.1} parent=1 // pred_check_branch
      %256 = sbr.rel (0) target = $region41
    $region40: #{tpu_custom_call.1} parent=1 // pred_region
      %s258 = ssub.s32 128, 128
      %259 = vsyncadd [#allocation6], %s258
      %s261 = sshll.u32 [#allocation9], 4
      %s262 = int_to_ptr.vmem [resolvable:$true] %s261
      %264 = dma.vmem_to_hbm [thread:$0]  %s262, 128, %s7, [#allocation6]
    $region41: #{tpu_custom_call.1} parent=1 // pred_fallthru
      _
    // Predicated region
    $region42: #{tpu_custom_call.1} parent=1 // pred_check
      _
    $region43: #{tpu_custom_call.1} parent=1 // pred_check_branch
      %266 = sbr.rel (0) target = $region45
    $region44: #{tpu_custom_call.1} parent=1 // pred_region
      %267 = dma.done [#allocation6], 128
    $region45: #{tpu_custom_call.1} parent=1 // pred_fallthru
      _
    %268 = vsyncpa [#allocation5], 1
    %269 = vsyncpa [#allocation8], 1
    %270 = vsyncpa [#allocation6], 1

</llo_original>
